<compile_context>
chip_gen: v7x
topology: tpu7x:2x2x1
jax: 0.10.0
libtpu: 0.0.40
codegen_flags: <defaults>
</compile_context>

<pallas_src>
import functools

import jax
import jax.numpy as jnp
from jax.experimental import pallas as pl
from jax.experimental.pallas import tpu as pltpu

O_PAD = 128            # lane-dense class dimension
NEG_INF = -1e30        # padded-class bias (finite, exp() underflows to 0)


def _round_up(x, m):
    return (x + m - 1) // m * m


def textcnn_kernel(emb_ref, wall_ref, cbias_ref, mask_ref, fcw_ref, fcb_ref,
                   out_ref, *, seq_len, seq_pad, group_pad, max_k):
    """Batched forward pass (post-embedding) for one batch tile.

    emb_ref  : (TB*Tp, E)        bf16  zero-padded embedded tokens, flattened
    wall_ref : (E, max_k*Gp)     bf16  conv kernels, shift-major, lane-padded
    cbias_ref: (1, Gp)           f32   conv biases (ki-blocks of C, lane-padded)
    mask_ref : (T, Gp)           f32   1.0 where time position valid for that K
    fcw_ref  : (Gp, O_PAD)       f32   fc weight (zero-padded)
    fcb_ref  : (1, O_PAD)        f32   fc bias (-1e30 on padded classes)
    out_ref  : (TB, O_PAD)       f32   log-softmax outputs (lane-dense store)
    """
    T, Tp, Gp = seq_len, seq_pad, group_pad
    BTp, _ = emb_ref.shape
    TB = BTp // Tp
    Np = wall_ref.shape[1]                       # max_k * Gp

    # --- one lane-dense MXU matmul for every conv kernel / shift / batch row ---
    x = emb_ref[...]                                             # (TB*Tp, E)
    y = jnp.dot(x, wall_ref[...],
                preferred_element_type=jnp.float32)              # (TB*Tp, Np) f32
    y = y.reshape(TB, Tp, Np)

    # --- shift accumulation: max_k full-width, 128-aligned lane-group adds ---
    acc = y[:, 0:T, 0:Gp]
    for k in range(1, max_k):
        acc = acc + y[:, k:k + T, k * Gp:(k + 1) * Gp]           # (TB, T, Gp)

    z = jnp.maximum(acc + cbias_ref[...][:, None, :], 0.0)       # bias + ReLU
    z = z * mask_ref[...][None, :, :]            # zero invalid trailing t per K
    feats = jnp.max(z, axis=1)                                   # (TB, Gp)

    # --- FC + numerically-stable log_softmax (padded classes at -1e30) ---
    logits = jnp.dot(feats, fcw_ref[...],
                     preferred_element_type=jnp.float32) + fcb_ref[...]
    m = jnp.max(logits, axis=1, keepdims=True)
    s = logits - m
    lse = jnp.log(jnp.sum(jnp.exp(s), axis=1, keepdims=True))
    out_ref[...] = s - lse                                       # lane-dense store


def cnn_classifier_forward(token_ids, params, kernel_sizes=(3, 4, 5),
                           compute_dtype=jnp.bfloat16):
    """Embedding gather in plain JAX, everything else in one Pallas kernel."""
    emb = jnp.take(params["embedding"], token_ids, axis=0).astype(compute_dtype)
    B, T, E = emb.shape
    nK = len(kernel_sizes)
    max_k = max(kernel_sizes)
    assert T >= max_k, "seq_len must be >= max(kernel_sizes)"
    C = params[f"b{kernel_sizes[0]}"].shape[-1]
    O = params["fc_b"].shape[-1]
    G = nK * C                                   # real feature width (3C)
    Gp = _round_up(G, 128)                       # lane-padded feature width
    Np = max_k * Gp                              # fused matmul N (multiple of 128)
    Tp = _round_up(T + max_k - 1, 8)             # padded time axis

    # --- fused, shift-major, lane-padded conv weight / bias / mask / fc ---
    groups = []
    for k in range(max_k):
        blocks = [params[f"w{K}"][k] if k < K else jnp.zeros((E, C), jnp.float32)
                  for K in kernel_sizes]
        grp = jnp.concatenate(blocks, axis=1)                     # (E, G)
        groups.append(jnp.pad(grp, ((0, 0), (0, Gp - G))))
    w_all = jnp.concatenate(groups, axis=1).astype(compute_dtype)  # (E, Np)

    cbias = jnp.concatenate([params[f"b{K}"] for K in kernel_sizes], axis=1)
    cbias = jnp.pad(cbias, ((0, 0), (0, Gp - G))).astype(jnp.float32)  # (1, Gp)

    lims = jnp.concatenate(
        [jnp.full((C,), T - K + 1, jnp.int32) for K in kernel_sizes])
    lims = jnp.pad(lims, (0, Gp - G))            # padded columns -> limit 0
    mask = (jnp.arange(T, dtype=jnp.int32)[:, None] < lims[None, :]
            ).astype(jnp.float32)                                  # (T, Gp)

    fcw = jnp.zeros((Gp, O_PAD), jnp.float32).at[:G, :O].set(
        params["fc_w"].astype(jnp.float32))
    fcb = jnp.full((1, O_PAD), NEG_INF, jnp.float32).at[:, :O].set(
        params["fc_b"].astype(jnp.float32))

    # --- batch-tile selection (per-generation VMEM aware) ---
    try:
        vmem_cap = int(pltpu.get_tpu_info().vmem_capacity_bytes)
    except Exception:
        vmem_cap = 64 * 1024 * 1024              # conservative: v7x per-TC VMEM
    vmem_limit = min(vmem_cap // 2, 96 * 1024 * 1024)
    budget = vmem_cap // 4                       # headroom for double-buffering
    bytes_per_row = (2 * Tp * E * 2              # emb tile, 2 buffers, bf16
                     + 2 * Tp * Np * 4           # y + shift-acc temp, f32
                     + 2 * T * Gp * 4            # relu/mask temps, f32
                     + 2 * O_PAD * 4)            # output, 2 buffers
    tb_cap = max(8, (budget // max(bytes_per_row, 1)) // 8 * 8)
    tb_target = _round_up(max(8, -(-512 // Tp)), 8)   # aim for >= ~512 MXU rows
    TB = min(tb_target, tb_cap, _round_up(B, 8))
    B_pad = _round_up(B, TB)

    emb_p = jnp.zeros((B_pad, Tp, E), compute_dtype).at[:B, :T, :].set(emb)
    emb_flat = emb_p.reshape(B_pad * Tp, E)

    kernel = functools.partial(textcnn_kernel, seq_len=T, seq_pad=Tp,
                               group_pad=Gp, max_k=max_k)

    cost = pl.CostEstimate(
        flops=2 * B_pad * Tp * E * Np + 2 * B_pad * Gp * O_PAD,
        transcendentals=B_pad * O_PAD,
        bytes_accessed=(B_pad * Tp * E * 2 + E * Np * 2 + Gp * 4 + T * Gp * 4
                        + Gp * O_PAD * 4 + O_PAD * 4 + B_pad * O_PAD * 4))

    out = pl.pallas_call(
        kernel,
        out_shape=jax.ShapeDtypeStruct((B_pad, O_PAD), jnp.float32),
        grid_spec=pltpu.PrefetchScalarGridSpec(
            num_scalar_prefetch=0,
            grid=(B_pad // TB,),
            in_specs=[
                pl.BlockSpec((TB * Tp, E), lambda i: (i, 0)),   # batch-tiled emb
                pl.BlockSpec((E, Np), lambda i: (0, 0)),        # fused conv weight
                pl.BlockSpec((1, Gp), lambda i: (0, 0)),        # conv bias
                pl.BlockSpec((T, Gp), lambda i: (0, 0)),        # validity mask
                pl.BlockSpec((Gp, O_PAD), lambda i: (0, 0)),    # fc weight
                pl.BlockSpec((1, O_PAD), lambda i: (0, 0)),     # fc bias
            ],
            out_specs=pl.BlockSpec((TB, O_PAD), lambda i: (i, 0)),
        ),
        compiler_params=pltpu.CompilerParams(
            dimension_semantics=("parallel",),
            vmem_limit_bytes=vmem_limit),
        cost_estimate=cost,
    )(emb_flat, w_all, cbias, mask, fcw, fcb)

    return out[:B, :O]


def init_params(key, vocab_size, embedding_dim, kernel_dim, kernel_sizes,
                output_size):
    """Deterministic synthetic parameters matching the torch module's shapes."""
    n_keys = 1 + 2 * len(kernel_sizes) + 2
    keys = jax.random.split(key, n_keys)
    params = {
        "embedding": jax.random.normal(keys[0], (vocab_size, embedding_dim),
                                       jnp.float32),
    }
    idx = 1
    for K in kernel_sizes:
        # torch Conv2d weight is (C, 1, K, E); store as (K, E, C) for the kernel
        params[f"w{K}"] = 0.1 * jax.random.normal(
            keys[idx], (K, embedding_dim, kernel_dim), jnp.float32)
        params[f"b{K}"] = 0.1 * jax.random.normal(
            keys[idx + 1], (1, kernel_dim), jnp.float32)
        idx += 2
    # torch Linear weight is (O, 3C); store transposed (3C, O)
    params["fc_w"] = 0.1 * jax.random.normal(
        keys[idx], (len(kernel_sizes) * kernel_dim, output_size), jnp.float32)
    params["fc_b"] = 0.1 * jax.random.normal(
        keys[idx + 1], (1, output_size), jnp.float32)
    return params


def reference_forward(token_ids, params, kernel_sizes,
                      compute_dtype=jnp.bfloat16):
    """Pure-JAX reference replicating the PyTorch forward (is_training=False),
    with the same bf16-input / f32-accumulation discipline as the kernel."""
    emb = jnp.take(params["embedding"], token_ids, axis=0).astype(compute_dtype)
    B, T, E = emb.shape
    feats = []
    for K in kernel_sizes:
        w = params[f"w{K}"].astype(compute_dtype)               # (K, E, C)
        b = params[f"b{K}"]
        L = T - K + 1
        conv = jnp.zeros((B, L, w.shape[-1]), jnp.float32)
        for k in range(K):
            conv = conv + jnp.einsum("ble,ec->blc", emb[:, k:k + L, :], w[k],
                                     preferred_element_type=jnp.float32)
        conv = jax.nn.relu(conv + b[None])                      # (B, L, C)
        feats.append(jnp.max(conv, axis=1))                     # (B, C)
    h = jnp.concatenate(feats, axis=1)                          # (B, 3C)
    logits = h @ params["fc_w"] + params["fc_b"]
    return jax.nn.log_softmax(logits, axis=1)


if __name__ == "__main__":
    # Small shapes consistent with the module (single-channel / multichannel=False).
    VOCAB_SIZE = 50
    EMBED_DIM = 32
    KERNEL_DIM = 16
    KERNEL_SIZES = (3, 4, 5)
    OUTPUT_SIZE = 4
    BATCH = 2
    SEQ_LEN = 8

    key = jax.random.PRNGKey(0)
    k_params, k_tokens = jax.random.split(key)

    params = init_params(k_params, VOCAB_SIZE, EMBED_DIM, KERNEL_DIM,
                         KERNEL_SIZES, OUTPUT_SIZE)
    token_ids = jax.random.randint(k_tokens, (BATCH, SEQ_LEN), 0, VOCAB_SIZE,
                                   dtype=jnp.int32)

    out = cnn_classifier_forward(token_ids, params, KERNEL_SIZES)
    out = jax.block_until_ready(out)

    ref = reference_forward(token_ids, params, KERNEL_SIZES)
    assert out.shape == (BATCH, OUTPUT_SIZE)
    assert jnp.allclose(out, ref, atol=2e-4, rtol=2e-4), (out, ref)

    print("KERNEL_OK")
</pallas_src>

<mosaic_0001>
module attributes {stable_mosaic.version = 11 : i64} {
  func.func @textcnn_kernel(%arg0: i32, %arg1: memref<128x32xbf16, #tpu.memory_space<vmem>>, %arg2: memref<32x640xbf16, #tpu.memory_space<vmem>>, %arg3: memref<1x128xf32, #tpu.memory_space<vmem>>, %arg4: memref<8x128xf32, #tpu.memory_space<vmem>>, %arg5: memref<128x128xf32, #tpu.memory_space<vmem>>, %arg6: memref<1x128xf32, #tpu.memory_space<vmem>>, %arg7: memref<8x128xf32, #tpu.memory_space<vmem>>) attributes {dimension_semantics = [#tpu.dimension_semantics<parallel>], iteration_bounds = array<i64: 1>, scalar_prefetch = 0 : i64, scratch_operands = 0 : i64, tpu.core_type = #tpu.core_type<tc>, window_params = [{transform_indices = @transform_0, window_bounds = array<i64: 128, 32>}, {pipeline_mode = #tpu.pipeline_mode<synchronous>, transform_indices = @transform_1, window_bounds = array<i64: 32, 640>}, {pipeline_mode = #tpu.pipeline_mode<synchronous>, transform_indices = @transform_2, window_bounds = array<i64: 1, 128>}, {pipeline_mode = #tpu.pipeline_mode<synchronous>, transform_indices = @transform_3, window_bounds = array<i64: 8, 128>}, {pipeline_mode = #tpu.pipeline_mode<synchronous>, transform_indices = @transform_4, window_bounds = array<i64: 128, 128>}, {pipeline_mode = #tpu.pipeline_mode<synchronous>, transform_indices = @transform_5, window_bounds = array<i64: 1, 128>}, {transform_indices = @transform_6, window_bounds = array<i64: 8, 128>}]} {
    %c0 = arith.constant 0 : index
    %c0_0 = arith.constant 0 : index
    %0 = vector.load %arg1[%c0, %c0_0] : memref<128x32xbf16, #tpu.memory_space<vmem>>, vector<128x32xbf16>
    %c0_1 = arith.constant 0 : index
    %c0_2 = arith.constant 0 : index
    %1 = vector.load %arg2[%c0_1, %c0_2] : memref<32x640xbf16, #tpu.memory_space<vmem>>, vector<32x640xbf16>
    %cst = arith.constant dense<0.000000e+00> : vector<128x640xf32>
    %2 = tpu.matmul %0, %1, %cst {dimension_numbers = #tpu.dot_dimension_numbers<[1], [0], [0], [1], [0, 0, 1, 1], [], []>} : vector<128x32xbf16>, vector<32x640xbf16>, vector<128x640xf32> -> vector<128x640xf32>
    %3 = vector.shape_cast %2 : vector<128x640xf32> to vector<8x16x640xf32>
    %4 = vector.extract_strided_slice %3 {offsets = [0, 0, 0], sizes = [8, 8, 128], strides = [1, 1, 1]} : vector<8x16x640xf32> to vector<8x8x128xf32>
    %5 = vector.extract_strided_slice %3 {offsets = [0, 1, 128], sizes = [8, 8, 128], strides = [1, 1, 1]} : vector<8x16x640xf32> to vector<8x8x128xf32>
    %6 = arith.addf %4, %5 : vector<8x8x128xf32>
    %7 = vector.extract_strided_slice %3 {offsets = [0, 2, 256], sizes = [8, 8, 128], strides = [1, 1, 1]} : vector<8x16x640xf32> to vector<8x8x128xf32>
    %8 = arith.addf %6, %7 : vector<8x8x128xf32>
    %9 = vector.extract_strided_slice %3 {offsets = [0, 3, 384], sizes = [8, 8, 128], strides = [1, 1, 1]} : vector<8x16x640xf32> to vector<8x8x128xf32>
    %10 = arith.addf %8, %9 : vector<8x8x128xf32>
    %11 = vector.extract_strided_slice %3 {offsets = [0, 4, 512], sizes = [8, 8, 128], strides = [1, 1, 1]} : vector<8x16x640xf32> to vector<8x8x128xf32>
    %12 = arith.addf %10, %11 : vector<8x8x128xf32>
    %c0_3 = arith.constant 0 : index
    %c0_4 = arith.constant 0 : index
    %13 = vector.load %arg3[%c0_3, %c0_4] : memref<1x128xf32, #tpu.memory_space<vmem>>, vector<1x128xf32>
    %14 = vector.shape_cast %13 : vector<1x128xf32> to vector<1x1x128xf32>
    %15 = vector.broadcast %14 : vector<1x1x128xf32> to vector<8x8x128xf32>
    %16 = arith.addf %12, %15 : vector<8x8x128xf32>
    %cst_5 = arith.constant 0.000000e+00 : f32
    %17 = vector.broadcast %cst_5 : f32 to vector<8x8x128xf32>
    %18 = arith.maximumf %16, %17 : vector<8x8x128xf32>
    %c0_6 = arith.constant 0 : index
    %c0_7 = arith.constant 0 : index
    %19 = vector.load %arg4[%c0_6, %c0_7] : memref<8x128xf32, #tpu.memory_space<vmem>>, vector<8x128xf32>
    %20 = vector.shape_cast %19 : vector<8x128xf32> to vector<1x8x128xf32>
    %21 = vector.broadcast %20 : vector<1x8x128xf32> to vector<8x8x128xf32>
    %22 = arith.mulf %18, %21 : vector<8x8x128xf32>
    %cst_8 = arith.constant dense<0xFF800000> : vector<8x128xf32>
    %23 = vector.multi_reduction <maximumf>, %22, %cst_8 [1] : vector<8x8x128xf32> to vector<8x128xf32>
    %c0_9 = arith.constant 0 : index
    %c0_10 = arith.constant 0 : index
    %24 = vector.load %arg5[%c0_9, %c0_10] : memref<128x128xf32, #tpu.memory_space<vmem>>, vector<128x128xf32>
    %cst_11 = arith.constant dense<0.000000e+00> : vector<8x128xf32>
    %25 = tpu.matmul %23, %24, %cst_11 {dimension_numbers = #tpu.dot_dimension_numbers<[1], [0], [0], [1], [0, 0, 1, 1], [], []>} : vector<8x128xf32>, vector<128x128xf32>, vector<8x128xf32> -> vector<8x128xf32>
    %c0_12 = arith.constant 0 : index
    %c0_13 = arith.constant 0 : index
    %26 = vector.load %arg6[%c0_12, %c0_13] : memref<1x128xf32, #tpu.memory_space<vmem>>, vector<1x128xf32>
    %27 = vector.broadcast %26 : vector<1x128xf32> to vector<8x128xf32>
    %28 = arith.addf %25, %27 : vector<8x128xf32>
    %cst_14 = arith.constant dense<0xFF800000> : vector<8xf32>
    %29 = vector.multi_reduction <maximumf>, %28, %cst_14 [1] : vector<8x128xf32> to vector<8xf32>
    %30 = vector.shape_cast %29 : vector<8xf32> to vector<8x1xf32>
    %31 = vector.broadcast %30 : vector<8x1xf32> to vector<8x128xf32>
    %32 = arith.subf %28, %31 : vector<8x128xf32>
    %33 = math.exp %32 : vector<8x128xf32>
    %cst_15 = arith.constant dense<0.000000e+00> : vector<8xf32>
    %34 = vector.multi_reduction <add>, %33, %cst_15 [1] : vector<8x128xf32> to vector<8xf32>
    %35 = vector.shape_cast %34 : vector<8xf32> to vector<8x1xf32>
    %36 = math.log %35 : vector<8x1xf32>
    %37 = vector.broadcast %36 : vector<8x1xf32> to vector<8x128xf32>
    %38 = arith.subf %32, %37 : vector<8x128xf32>
    %c0_16 = arith.constant 0 : index
    %c0_17 = arith.constant 0 : index
    %39 = vector.load %arg7[%c0_16, %c0_17] : memref<8x128xf32, #tpu.memory_space<vmem>>, vector<8x128xf32>
    tpu.vector_store %arg7[%c0_16, %c0_17], %38 {strides = array<i32>} : memref<8x128xf32, #tpu.memory_space<vmem>>, vector<8x128xf32>,
    return
  }
  func.func @transform_0(%arg0: i32) -> (i32, i32) {
    %c0_i32 = arith.constant 0 : i32
    %c0_i32_0 = arith.constant 0 : i32
    return %arg0, %c0_i32 : i32, i32
  }
  func.func @transform_1(%arg0: i32) -> (i32, i32) {
    %c0_i32 = arith.constant 0 : i32
    %c0_i32_0 = arith.constant 0 : i32
    %c0_i32_1 = arith.constant 0 : i32
    return %c0_i32, %c0_i32_0 : i32, i32
  }
  func.func @transform_2(%arg0: i32) -> (i32, i32) {
    %c0_i32 = arith.constant 0 : i32
    %c0_i32_0 = arith.constant 0 : i32
    %c0_i32_1 = arith.constant 0 : i32
    return %c0_i32, %c0_i32_0 : i32, i32
  }
  func.func @transform_3(%arg0: i32) -> (i32, i32) {
    %c0_i32 = arith.constant 0 : i32
    %c0_i32_0 = arith.constant 0 : i32
    %c0_i32_1 = arith.constant 0 : i32
    return %c0_i32, %c0_i32_0 : i32, i32
  }
  func.func @transform_4(%arg0: i32) -> (i32, i32) {
    %c0_i32 = arith.constant 0 : i32
    %c0_i32_0 = arith.constant 0 : i32
    %c0_i32_1 = arith.constant 0 : i32
    return %c0_i32, %c0_i32_0 : i32, i32
  }
  func.func @transform_5(%arg0: i32) -> (i32, i32) {
    %c0_i32 = arith.constant 0 : i32
    %c0_i32_0 = arith.constant 0 : i32
    %c0_i32_1 = arith.constant 0 : i32
    return %c0_i32, %c0_i32_0 : i32, i32
  }
  func.func @transform_6(%arg0: i32) -> (i32, i32) {
    %c0_i32 = arith.constant 0 : i32
    %c0_i32_0 = arith.constant 0 : i32
    return %arg0, %c0_i32 : i32, i32
  }
}

</mosaic_0001>

<llo_original>
// kernel: tpu_custom_call.1
$region0: #{tpu_custom_call.1}
  #allocation0 [shape = 'u32[]', space=smem, size = 0x4, offset = 0x4, fixed_abs, tag = 'smem constant byte address 0x4 - core index']
  #allocation1 [shape = 'u32[144,128]{1,0:T(1,128)}', space=vmem, size = 0x12000, scoped, tag = 'internal scratch']
  %s0 = inlined_call_operand.vmem [shape: bf16[128,32], index: 0, kind: input, shape index: {}]
  %s1 = inlined_call_operand.vmem [shape: bf16[32,640], index: 1, kind: input, shape index: {}]
  %s2 = inlined_call_operand.vmem [shape: f32[1,128], index: 2, kind: input, shape index: {}]
  %s3 = inlined_call_operand.vmem [shape: f32[8,128], index: 3, kind: input, shape index: {}]
  %s4 = inlined_call_operand.hbm [shape: f32[128,128], index: 4, kind: input, shape index: {}]
  %s5 = inlined_call_operand.vmem [shape: f32[1,128], index: 5, kind: input, shape index: {}]
  %s6 = inlined_call_operand.hbm [shape: f32[8,128], index: 6, kind: output, shape index: {}]
  %s7 = sld [smem:[#allocation0]]
  $region38: #{tpu_custom_call.1} parent=0
    _
  %s9 = ssub.s32 1, %s7
  %s10 = scalar_select 0, %s9, %s7
  $region1: #{tpu_custom_call.1} parent=0
    #allocation2 [shape = 'u8[65536]{0}', space=vmem, size = 0x10000, scoped, tag = 'input window, operand 4, single buffered']
    #allocation3 [shape = 's32[1]{0}', space=sflag, size = 0x4, scoped, tag = 'scoped memory for tpu_custom_call.1']
    #allocation4 [shape = 's32[1]{0}', space=sflag, size = 0x4, scoped, tag = 'scoped memory for tpu_custom_call.1']
    #allocation5 [shape = 'u8[4096]{0}', space=vmem, size = 0x1000, scoped, tag = 'output window, operand 0, single buffered']
    %11 = vsyncpa [#allocation3], 0
    %12 = vsyncpa [#allocation4], 0
    // Predicated region
    $region2: #{tpu_custom_call.1} parent=1 // pred_check
      _
    $region3: #{tpu_custom_call.1} parent=1 // pred_check_branch
      %14 = sbr.rel (0) target = $region5
    $region4: #{tpu_custom_call.1} parent=1 // pred_region
      _
    $region5: #{tpu_custom_call.1} parent=1 // pred_fallthru
      _
    // Predicated region
    $region6: #{tpu_custom_call.1} parent=1 // pred_check
      _
    $region7: #{tpu_custom_call.1} parent=1 // pred_check_branch
      %16 = sbr.rel (0) target = $region9
    $region8: #{tpu_custom_call.1} parent=1 // pred_region
      _
    $region9: #{tpu_custom_call.1} parent=1 // pred_fallthru
      _
    // Predicated region
    $region10: #{tpu_custom_call.1} parent=1 // pred_check
      _
    $region11: #{tpu_custom_call.1} parent=1 // pred_check_branch
      %18 = sbr.rel (0) target = $region13
    $region12: #{tpu_custom_call.1} parent=1 // pred_region
      _
    $region13: #{tpu_custom_call.1} parent=1 // pred_fallthru
      _
    // Predicated region
    $region14: #{tpu_custom_call.1} parent=1 // pred_check
      _
    $region15: #{tpu_custom_call.1} parent=1 // pred_check_branch
      %20 = sbr.rel (0) target = $region17
    $region16: #{tpu_custom_call.1} parent=1 // pred_region
      _
    $region17: #{tpu_custom_call.1} parent=1 // pred_fallthru
      _
    // Predicated region
    $region18: #{tpu_custom_call.1} parent=1 // pred_check
      _
    $region19: #{tpu_custom_call.1} parent=1 // pred_check_branch
      %22 = sbr.rel (0) target = $region21
    $region20: #{tpu_custom_call.1} parent=1 // pred_region
      %s24 = ssub.s32 2048, 2048
      %25 = vsyncadd [#allocation3], %s24
      %s26 = sshll.u32 [#allocation2], 4
      %s27 = int_to_ptr.vmem [resolvable:$true] %s26
      %32 = dma.hbm_to_vmem [thread:$0]  %s4, 2048, %s27, [#allocation3], 128, 128, 8
    $region21: #{tpu_custom_call.1} parent=1 // pred_fallthru
      _
    // Predicated region
    $region22: #{tpu_custom_call.1} parent=1 // pred_check
      _
    $region23: #{tpu_custom_call.1} parent=1 // pred_check_branch
      %34 = sbr.rel (0) target = $region25
    $region24: #{tpu_custom_call.1} parent=1 // pred_region
      _
    $region25: #{tpu_custom_call.1} parent=1 // pred_fallthru
      _
    // Predicated region
    $region26: #{tpu_custom_call.1} parent=1 // pred_check
      _
    $region27: #{tpu_custom_call.1} parent=1 // pred_check_branch
      %36 = sbr.rel (0) target = $region29
    $region28: #{tpu_custom_call.1} parent=1 // pred_region
      %37 = dma.done [#allocation3], 2048
    $region29: #{tpu_custom_call.1} parent=1 // pred_fallthru
      _
    %v39 = vld [vmem:[%s0] sm:$0xf]
    %v40 = vld [vmem:[%s0 + $0x4] sm:$0xf]
    %v41 = vld [vmem:[%s0 + $0x8] sm:$0xf]
    %v42 = vld [vmem:[%s0 + $0xc] sm:$0xf]
    %v43 = vld [vmem:[%s0 + $0x10] sm:$0xf]
    %v44 = vld [vmem:[%s0 + $0x14] sm:$0xf]
    %v45 = vld [vmem:[%s0 + $0x18] sm:$0xf]
    %v46 = vld [vmem:[%s0 + $0x1c] sm:$0xf]
    %v47 = vld [vmem:[%s0 + $0x20] sm:$0xf]
    %v48 = vld [vmem:[%s0 + $0x24] sm:$0xf]
    %v49 = vld [vmem:[%s0 + $0x28] sm:$0xf]
    %v50 = vld [vmem:[%s0 + $0x2c] sm:$0xf]
    %v51 = vld [vmem:[%s0 + $0x30] sm:$0xf]
    %v52 = vld [vmem:[%s0 + $0x34] sm:$0xf]
    %v53 = vld [vmem:[%s0 + $0x38] sm:$0xf]
    %v54 = vld [vmem:[%s0 + $0x3c] sm:$0xf]
    %v55 = vld [vmem:[%s1] sm:$0xff]
    %v56 = vld [vmem:[%s1 + $0x8] sm:$0xff]
    %v57 = vld [vmem:[%s1 + $0x10] sm:$0xf]
    %v58 = vld [vmem:[%s1 + $0x14] sm:$0xff]
    %v59 = vld [vmem:[%s1 + $0x1c] sm:$0xff]
    %v60 = vld [vmem:[%s1 + $0x24] sm:$0xf]
    %v61 = vld [vmem:[%s1 + $0x28] sm:$0xff]
    %v62 = vld [vmem:[%s1 + $0x30] sm:$0xff]
    %v63 = vld [vmem:[%s1 + $0x38] sm:$0xf]
    %v64 = vld [vmem:[%s1 + $0x3c] sm:$0xff]
    %v65 = vld [vmem:[%s1 + $0x44] sm:$0xff]
    %v66 = vld [vmem:[%s1 + $0x4c] sm:$0xf]
    %v83 = vunpack.c.l.b16 %v39
    %v84 = vunpack.c.l.b16 %v40
    %v85 = vunpack.c.l.b16 %v41
    %v86 = vunpack.c.l.b16 %v42
    %v87 = vunpack.c.l.b16 %v43
    %v88 = vunpack.c.l.b16 %v44
    %v89 = vunpack.c.l.b16 %v45
    %v90 = vunpack.c.l.b16 %v46
    %v91 = vunpack.c.l.b16 %v47
    %v92 = vunpack.c.l.b16 %v48
    %v93 = vunpack.c.l.b16 %v49
    %v94 = vunpack.c.l.b16 %v50
    %v95 = vunpack.c.l.b16 %v51
    %v96 = vunpack.c.l.b16 %v52
    %v97 = vunpack.c.l.b16 %v53
    %v98 = vunpack.c.l.b16 %v54
    %v99 = vpack.c.b16 %v84, %v83
    %v100 = vpack.c.b16 %v86, %v85
    %v101 = vpack.c.b16 %v88, %v87
    %v102 = vpack.c.b16 %v90, %v89
    %v103 = vpack.c.b16 %v92, %v91
    %v104 = vpack.c.b16 %v94, %v93
    %v105 = vpack.c.b16 %v96, %v95
    %v106 = vpack.c.b16 %v98, %v97
    %v119 = vunpack.c.l.b16 %v55
    %v120 = vunpack.c.h.b16 %v55
    %v121 = vunpack.c.l.b16 %v56
    %v122 = vunpack.c.h.b16 %v56
    %v123 = vunpack.c.l.b16 %v57
    %v124 = vunpack.c.l.b16 %v58
    %v125 = vunpack.c.h.b16 %v58
    %v126 = vunpack.c.l.b16 %v59
    %v127 = vunpack.c.h.b16 %v59
    %v128 = vunpack.c.l.b16 %v60
    %v129 = vunpack.c.l.b16 %v61
    %v130 = vunpack.c.h.b16 %v61
    %v131 = vunpack.c.l.b16 %v62
    %v132 = vunpack.c.h.b16 %v62
    %v133 = vunpack.c.l.b16 %v63
    %v134 = vunpack.c.l.b16 %v64
    %v135 = vunpack.c.h.b16 %v64
    %v136 = vunpack.c.l.b16 %v65
    %v137 = vunpack.c.h.b16 %v65
    %v138 = vunpack.c.l.b16 %v66
    %v139 = vpack.c.b16 %v124, %v119
    %v140 = vpack.c.b16 %v125, %v120
    %v141 = vpack.c.b16 %v126, %v121
    %v142 = vpack.c.b16 %v127, %v122
    %v143 = vpack.c.b16 %v128, %v123
    %v144 = vpack.c.b16 %v134, %v129
    %v145 = vpack.c.b16 %v135, %v130
    %v146 = vpack.c.b16 %v136, %v131
    %v147 = vpack.c.b16 %v137, %v132
    %v148 = vpack.c.b16 %v138, %v133
    %vm159 = vcmask 261120
    %v161 = vsel %vm159, %v99, 0
    %v164 = vsel %vm159, %v100, 0
    %v167 = vsel %vm159, %v101, 0
    %v170 = vsel %vm159, %v102, 0
    %v173 = vsel %vm159, %v103, 0
    %v176 = vsel %vm159, %v104, 0
    %v179 = vsel %vm159, %v105, 0
    %v182 = vsel %vm159, %v106, 0
    %184 = vmatprep.subr.bf16.mxu0 %v140
    %185 = vmatpush1.bf16.msra.mxu0 %v139
    %186 = vmatprep.subr.bf16.mxu0 %v145
    %187 = vmatpush1.bf16.msra.mxu0 %v144
    %188 = vmatprep.subr.bf16.mxu0 0
    %189 = vmatpush1.bf16.msra.mxu0 0
    %190 = vmatprep.subr.bf16.mxu0 0
    %191 = vmatpush1.bf16.msra.mxu0 0
    %192 = vmatprep.subr.bf16.mxu0 0
    %193 = vmatpush1.bf16.msra.mxu0 0
    %194 = vmatprep.subr.bf16.mxu0 0
    %195 = vmatpush1.bf16.msra.mxu0 0
    %196 = vmatprep.subr.bf16.mxu0 0
    %197 = vmatpush1.bf16.msra.mxu0 0
    %198 = vmatprep.subr.bf16.mxu0 0
    %199 = vmatpush1.bf16.msra.mxu0 0
    %200 = vmatprep.subr.bf16.mxu0 0
    %201 = vmatpush1.bf16.msra.mxu0 0
    %202 = vmatprep.subr.bf16.mxu0 0
    %203 = vmatpush1.bf16.msra.mxu0 0
    %204 = vmatprep.subr.bf16.mxu0 0
    %205 = vmatpush1.bf16.msra.mxu0 0
    %206 = vmatprep.subr.bf16.mxu0 0
    %207 = vmatpush1.bf16.msra.mxu0 0
    %208 = vmatprep.subr.bf16.mxu0 0
    %209 = vmatpush1.bf16.msra.mxu0 0
    %210 = vmatprep.subr.bf16.mxu0 0
    %211 = vmatpush1.bf16.msra.mxu0 0
    %212 = vmatprep.subr.bf16.mxu0 0
    %213 = vmatpush1.bf16.msra.mxu0 0
    %214 = vmatprep.subr.bf16.mxu0 0
    %215 = vmatpush1.bf16.msra.mxu0 0
    %216 = vmatprep.mubr.bf16.mxu0 0
    %217 = vmatmul.mubr.bf16.gmra.mrb[0].mxu0 %v161
    %v218 = vpop.f32.mrb[0].mxu0
    %v219 = vadd.f32 0.0, %v218
    %v220 = vpop.f32.mrb[0].mxu0
    %v221 = vadd.f32 0.0, %v220
    %v222 = vpop.f32.mrb[0].mxu0
    %v223 = vpop.f32.mrb[0].mxu0
    %v224 = vadd.f32 0.0, %v223
    %225 = vmatprep.mubr.bf16.mxu0 0
    %226 = vmatmul.mubr.bf16.gmra.mrb[0].mxu0 %v164
    %v227 = vpop.f32.mrb[0].mxu0
    %v228 = vadd.f32 0.0, %v227
    %v229 = vpop.f32.mrb[0].mxu0
    %v230 = vadd.f32 0.0, %v229
    %v231 = vpop.f32.mrb[0].mxu0
    %v232 = vpop.f32.mrb[0].mxu0
    %v233 = vadd.f32 0.0, %v232
    %234 = vmatprep.mubr.bf16.mxu0 0
    %235 = vmatmul.mubr.bf16.gmra.mrb[0].mxu0 %v167
    %v236 = vpop.f32.mrb[0].mxu0
    %v237 = vadd.f32 0.0, %v236
    %v238 = vpop.f32.mrb[0].mxu0
    %v239 = vadd.f32 0.0, %v238
    %v240 = vpop.f32.mrb[0].mxu0
    %v241 = vpop.f32.mrb[0].mxu0
    %v242 = vadd.f32 0.0, %v241
    %243 = vmatprep.mubr.bf16.mxu0 0
    %244 = vmatmul.mubr.bf16.gmra.mrb[0].mxu0 %v170
    %v245 = vpop.f32.mrb[0].mxu0
    %v246 = vadd.f32 0.0, %v245
    %v247 = vpop.f32.mrb[0].mxu0
    %v248 = vadd.f32 0.0, %v247
    %v249 = vpop.f32.mrb[0].mxu0
    %v250 = vpop.f32.mrb[0].mxu0
    %v251 = vadd.f32 0.0, %v250
    %252 = vmatprep.mubr.bf16.mxu0 0
    %253 = vmatmul.mubr.bf16.gmra.mrb[0].mxu0 %v173
    %v254 = vpop.f32.mrb[0].mxu0
    %v255 = vadd.f32 0.0, %v254
    %v256 = vpop.f32.mrb[0].mxu0
    %v257 = vadd.f32 0.0, %v256
    %v258 = vpop.f32.mrb[0].mxu0
    %v259 = vpop.f32.mrb[0].mxu0
    %v260 = vadd.f32 0.0, %v259
    %261 = vmatprep.mubr.bf16.mxu0 0
    %262 = vmatmul.mubr.bf16.gmra.mrb[0].mxu0 %v176
    %v263 = vpop.f32.mrb[0].mxu0
    %v264 = vadd.f32 0.0, %v263
    %v265 = vpop.f32.mrb[0].mxu0
    %v266 = vadd.f32 0.0, %v265
    %v267 = vpop.f32.mrb[0].mxu0
    %v268 = vpop.f32.mrb[0].mxu0
    %v269 = vadd.f32 0.0, %v268
    %270 = vmatprep.mubr.bf16.mxu0 0
    %271 = vmatmul.mubr.bf16.gmra.mrb[0].mxu0 %v179
    %v272 = vpop.f32.mrb[0].mxu0
    %v273 = vadd.f32 0.0, %v272
    %v274 = vpop.f32.mrb[0].mxu0
    %v275 = vadd.f32 0.0, %v274
    %v276 = vpop.f32.mrb[0].mxu0
    %v277 = vpop.f32.mrb[0].mxu0
    %v278 = vadd.f32 0.0, %v277
    %279 = vmatprep.mubr.bf16.mxu0 0
    %280 = vmatmul.mubr.bf16.gmra.mrb[0].mxu0 %v182
    %v281 = vpop.f32.mrb[0].mxu0
    %v282 = vadd.f32 0.0, %v281
    %v283 = vpop.f32.mrb[0].mxu0
    %v284 = vadd.f32 0.0, %v283
    %v285 = vpop.f32.mrb[0].mxu0
    %v286 = vpop.f32.mrb[0].mxu0
    %v287 = vadd.f32 0.0, %v286
    %288 = vdwg.mxu0
    %289 = vmatprep.subr.bf16.mxu0 %v142
    %290 = vmatpush1.bf16.msra.mxu0 %v141
    %291 = vmatprep.subr.bf16.mxu0 %v147
    %292 = vmatpush1.bf16.msra.mxu0 %v146
    %293 = vmatprep.subr.bf16.mxu0 0
    %294 = vmatpush1.bf16.msra.mxu0 0
    %295 = vmatprep.subr.bf16.mxu0 0
    %296 = vmatpush1.bf16.msra.mxu0 0
    %297 = vmatprep.subr.bf16.mxu0 0
    %298 = vmatpush1.bf16.msra.mxu0 0
    %299 = vmatprep.subr.bf16.mxu0 0
    %300 = vmatpush1.bf16.msra.mxu0 0
    %301 = vmatprep.subr.bf16.mxu0 0
    %302 = vmatpush1.bf16.msra.mxu0 0
    %303 = vmatprep.subr.bf16.mxu0 0
    %304 = vmatpush1.bf16.msra.mxu0 0
    %305 = vmatprep.subr.bf16.mxu0 0
    %306 = vmatpush1.bf16.msra.mxu0 0
    %307 = vmatprep.subr.bf16.mxu0 0
    %308 = vmatpush1.bf16.msra.mxu0 0
    %309 = vmatprep.subr.bf16.mxu0 0
    %310 = vmatpush1.bf16.msra.mxu0 0
    %311 = vmatprep.subr.bf16.mxu0 0
    %312 = vmatpush1.bf16.msra.mxu0 0
    %313 = vmatprep.subr.bf16.mxu0 0
    %314 = vmatpush1.bf16.msra.mxu0 0
    %315 = vmatprep.subr.bf16.mxu0 0
    %316 = vmatpush1.bf16.msra.mxu0 0
    %317 = vmatprep.subr.bf16.mxu0 0
    %318 = vmatpush1.bf16.msra.mxu0 0
    %319 = vmatprep.subr.bf16.mxu0 0
    %320 = vmatpush1.bf16.msra.mxu0 0
    %321 = vmatprep.mubr.bf16.mxu0 0
    %322 = vmatmul.mubr.bf16.gmra.mrb[0].mxu0 %v161
    %v323 = vpop.f32.mrb[0].mxu0
    %v324 = vadd.f32 0.0, %v323
    %v325 = vpop.f32.mrb[0].mxu0
    %v326 = vadd.f32 0.0, %v325
    %v327 = vpop.f32.mrb[0].mxu0
    %v328 = vadd.f32 0.0, %v327
    %v329 = vpop.f32.mrb[0].mxu0
    %v330 = vadd.f32 0.0, %v329
    %331 = vmatprep.mubr.bf16.mxu0 0
    %332 = vmatmul.mubr.bf16.gmra.mrb[0].mxu0 %v164
    %v333 = vpop.f32.mrb[0].mxu0
    %v334 = vadd.f32 0.0, %v333
    %v335 = vpop.f32.mrb[0].mxu0
    %v336 = vadd.f32 0.0, %v335
    %v337 = vpop.f32.mrb[0].mxu0
    %v338 = vadd.f32 0.0, %v337
    %v339 = vpop.f32.mrb[0].mxu0
    %v340 = vadd.f32 0.0, %v339
    %341 = vmatprep.mubr.bf16.mxu0 0
    %342 = vmatmul.mubr.bf16.gmra.mrb[0].mxu0 %v167
    %v343 = vpop.f32.mrb[0].mxu0
    %v344 = vadd.f32 0.0, %v343
    %v345 = vpop.f32.mrb[0].mxu0
    %v346 = vadd.f32 0.0, %v345
    %v347 = vpop.f32.mrb[0].mxu0
    %v348 = vadd.f32 0.0, %v347
    %v349 = vpop.f32.mrb[0].mxu0
    %v350 = vadd.f32 0.0, %v349
    %351 = vmatprep.mubr.bf16.mxu0 0
    %352 = vmatmul.mubr.bf16.gmra.mrb[0].mxu0 %v170
    %v353 = vpop.f32.mrb[0].mxu0
    %v354 = vadd.f32 0.0, %v353
    %v355 = vpop.f32.mrb[0].mxu0
    %v356 = vadd.f32 0.0, %v355
    %v357 = vpop.f32.mrb[0].mxu0
    %v358 = vadd.f32 0.0, %v357
    %v359 = vpop.f32.mrb[0].mxu0
    %v360 = vadd.f32 0.0, %v359
    %361 = vmatprep.mubr.bf16.mxu0 0
    %362 = vmatmul.mubr.bf16.gmra.mrb[0].mxu0 %v173
    %v363 = vpop.f32.mrb[0].mxu0
    %v364 = vadd.f32 0.0, %v363
    %v365 = vpop.f32.mrb[0].mxu0
    %v366 = vadd.f32 0.0, %v365
    %v367 = vpop.f32.mrb[0].mxu0
    %v368 = vadd.f32 0.0, %v367
    %v369 = vpop.f32.mrb[0].mxu0
    %v370 = vadd.f32 0.0, %v369
    %371 = vmatprep.mubr.bf16.mxu0 0
    %372 = vmatmul.mubr.bf16.gmra.mrb[0].mxu0 %v176
    %v373 = vpop.f32.mrb[0].mxu0
    %v374 = vadd.f32 0.0, %v373
    %v375 = vpop.f32.mrb[0].mxu0
    %v376 = vadd.f32 0.0, %v375
    %v377 = vpop.f32.mrb[0].mxu0
    %v378 = vadd.f32 0.0, %v377
    %v379 = vpop.f32.mrb[0].mxu0
    %v380 = vadd.f32 0.0, %v379
    %381 = vmatprep.mubr.bf16.mxu0 0
    %382 = vmatmul.mubr.bf16.gmra.mrb[0].mxu0 %v179
    %v383 = vpop.f32.mrb[0].mxu0
    %v384 = vadd.f32 0.0, %v383
    %v385 = vpop.f32.mrb[0].mxu0
    %v386 = vadd.f32 0.0, %v385
    %v387 = vpop.f32.mrb[0].mxu0
    %v388 = vadd.f32 0.0, %v387
    %v389 = vpop.f32.mrb[0].mxu0
    %v390 = vadd.f32 0.0, %v389
    %391 = vmatprep.mubr.bf16.mxu0 0
    %392 = vmatmul.mubr.bf16.gmra.mrb[0].mxu0 %v182
    %v393 = vpop.f32.mrb[0].mxu0
    %v394 = vadd.f32 0.0, %v393
    %v395 = vpop.f32.mrb[0].mxu0
    %v396 = vadd.f32 0.0, %v395
    %v397 = vpop.f32.mrb[0].mxu0
    %v398 = vadd.f32 0.0, %v397
    %v399 = vpop.f32.mrb[0].mxu0
    %v400 = vadd.f32 0.0, %v399
    %401 = vdwg.mxu0
    %402 = vmatprep.subr.bf16.mxu0 0
    %403 = vmatpush1.bf16.msra.mxu0 %v143
    %404 = vmatprep.subr.bf16.mxu0 0
    %405 = vmatpush1.bf16.msra.mxu0 %v148
    %406 = vmatprep.subr.bf16.mxu0 0
    %407 = vmatpush1.bf16.msra.mxu0 0
    %408 = vmatprep.subr.bf16.mxu0 0
    %409 = vmatpush1.bf16.msra.mxu0 0
    %410 = vmatprep.subr.bf16.mxu0 0
    %411 = vmatpush1.bf16.msra.mxu0 0
    %412 = vmatprep.subr.bf16.mxu0 0
    %413 = vmatpush1.bf16.msra.mxu0 0
    %414 = vmatprep.subr.bf16.mxu0 0
    %415 = vmatpush1.bf16.msra.mxu0 0
    %416 = vmatprep.subr.bf16.mxu0 0
    %417 = vmatpush1.bf16.msra.mxu0 0
    %418 = vmatprep.subr.bf16.mxu0 0
    %419 = vmatpush1.bf16.msra.mxu0 0
    %420 = vmatprep.subr.bf16.mxu0 0
    %421 = vmatpush1.bf16.msra.mxu0 0
    %422 = vmatprep.subr.bf16.mxu0 0
    %423 = vmatpush1.bf16.msra.mxu0 0
    %424 = vmatprep.subr.bf16.mxu0 0
    %425 = vmatpush1.bf16.msra.mxu0 0
    %426 = vmatprep.subr.bf16.mxu0 0
    %427 = vmatpush1.bf16.msra.mxu0 0
    %428 = vmatprep.subr.bf16.mxu0 0
    %429 = vmatpush1.bf16.msra.mxu0 0
    %430 = vmatprep.subr.bf16.mxu0 0
    %431 = vmatpush1.bf16.msra.mxu0 0
    %432 = vmatprep.subr.bf16.mxu0 0
    %433 = vmatpush1.bf16.msra.mxu0 0
    %434 = vmatprep.mubr.bf16.mxu0 0
    %435 = vmatmul.mubr.bf16.gmra.mrb[0].mxu0 %v161
    %v436 = vpop.f32.mrb[0].mxu0
    %v437 = vadd.f32 0.0, %v436
    %v438 = vpop.f32.mrb[0].mxu0
    %v439 = vpop.f32.mrb[0].mxu0
    %v440 = vadd.f32 0.0, %v439
    %v441 = vpop.f32.mrb[0].mxu0
    %442 = vmatprep.mubr.bf16.mxu0 0
    %443 = vmatmul.mubr.bf16.gmra.mrb[0].mxu0 %v164
    %v444 = vpop.f32.mrb[0].mxu0
    %v445 = vadd.f32 0.0, %v444
    %v446 = vpop.f32.mrb[0].mxu0
    %v447 = vpop.f32.mrb[0].mxu0
    %v448 = vadd.f32 0.0, %v447
    %v449 = vpop.f32.mrb[0].mxu0
    %450 = vmatprep.mubr.bf16.mxu0 0
    %451 = vmatmul.mubr.bf16.gmra.mrb[0].mxu0 %v167
    %v452 = vpop.f32.mrb[0].mxu0
    %v453 = vadd.f32 0.0, %v452
    %v454 = vpop.f32.mrb[0].mxu0
    %v455 = vpop.f32.mrb[0].mxu0
    %v456 = vadd.f32 0.0, %v455
    %v457 = vpop.f32.mrb[0].mxu0
    %458 = vmatprep.mubr.bf16.mxu0 0
    %459 = vmatmul.mubr.bf16.gmra.mrb[0].mxu0 %v170
    %v460 = vpop.f32.mrb[0].mxu0
    %v461 = vadd.f32 0.0, %v460
    %v462 = vpop.f32.mrb[0].mxu0
    %v463 = vpop.f32.mrb[0].mxu0
    %v464 = vadd.f32 0.0, %v463
    %v465 = vpop.f32.mrb[0].mxu0
    %466 = vmatprep.mubr.bf16.mxu0 0
    %467 = vmatmul.mubr.bf16.gmra.mrb[0].mxu0 %v173
    %v468 = vpop.f32.mrb[0].mxu0
    %v469 = vadd.f32 0.0, %v468
    %v470 = vpop.f32.mrb[0].mxu0
    %v471 = vpop.f32.mrb[0].mxu0
    %v472 = vadd.f32 0.0, %v471
    %v473 = vpop.f32.mrb[0].mxu0
    %474 = vmatprep.mubr.bf16.mxu0 0
    %475 = vmatmul.mubr.bf16.gmra.mrb[0].mxu0 %v176
    %v476 = vpop.f32.mrb[0].mxu0
    %v477 = vadd.f32 0.0, %v476
    %v478 = vpop.f32.mrb[0].mxu0
    %v479 = vpop.f32.mrb[0].mxu0
    %v480 = vadd.f32 0.0, %v479
    %v481 = vpop.f32.mrb[0].mxu0
    %482 = vmatprep.mubr.bf16.mxu0 0
    %483 = vmatmul.mubr.bf16.gmra.mrb[0].mxu0 %v179
    %v484 = vpop.f32.mrb[0].mxu0
    %v485 = vadd.f32 0.0, %v484
    %v486 = vpop.f32.mrb[0].mxu0
    %v487 = vpop.f32.mrb[0].mxu0
    %v488 = vadd.f32 0.0, %v487
    %v489 = vpop.f32.mrb[0].mxu0
    %490 = vmatprep.mubr.bf16.mxu0 0
    %491 = vmatmul.mubr.bf16.gmra.mrb[0].mxu0 %v182
    %v492 = vpop.f32.mrb[0].mxu0
    %v493 = vadd.f32 0.0, %v492
    %v494 = vpop.f32.mrb[0].mxu0
    %v495 = vpop.f32.mrb[0].mxu0
    %v496 = vadd.f32 0.0, %v495
    %v497 = vpop.f32.mrb[0].mxu0
    %498 = vdwg.mxu0
    %vm515 = vcmask 1046528
    %v516 = vrot.slane %v221, 1
    %v517 = vrot.slane %v224, 1
    %v518 = vsel %vm515, %v516, %v517
    %v519 = vrot.slane %v230, 1
    %v520 = vrot.slane %v233, 1
    %v521 = vsel %vm515, %v519, %v520
    %v522 = vrot.slane %v239, 1
    %v523 = vrot.slane %v242, 1
    %v524 = vsel %vm515, %v522, %v523
    %v525 = vrot.slane %v248, 1
    %v526 = vrot.slane %v251, 1
    %v527 = vsel %vm515, %v525, %v526
    %v528 = vrot.slane %v257, 1
    %v529 = vrot.slane %v260, 1
    %v530 = vsel %vm515, %v528, %v529
    %v531 = vrot.slane %v266, 1
    %v532 = vrot.slane %v269, 1
    %v533 = vsel %vm515, %v531, %v532
    %v534 = vrot.slane %v275, 1
    %v535 = vrot.slane %v278, 1
    %v536 = vsel %vm515, %v534, %v535
    %v537 = vrot.slane %v284, 1
    %v538 = vrot.slane %v287, 1
    %v539 = vsel %vm515, %v537, %v538
    %v548 = vadd.f32 %v219, %v518
    %v549 = vadd.f32 %v228, %v521
    %v550 = vadd.f32 %v237, %v524
    %v551 = vadd.f32 %v246, %v527
    %v552 = vadd.f32 %v255, %v530
    %v553 = vadd.f32 %v264, %v533
    %v554 = vadd.f32 %v273, %v536
    %v555 = vadd.f32 %v282, %v539
    %vm572 = vcmask 1045504
    %v573 = vrot.slane %v324, 2
    %v574 = vrot.slane %v328, 2
    %v575 = vsel %vm572, %v573, %v574
    %v576 = vrot.slane %v334, 2
    %v577 = vrot.slane %v338, 2
    %v578 = vsel %vm572, %v576, %v577
    %v579 = vrot.slane %v344, 2
    %v580 = vrot.slane %v348, 2
    %v581 = vsel %vm572, %v579, %v580
    %v582 = vrot.slane %v354, 2
    %v583 = vrot.slane %v358, 2
    %v584 = vsel %vm572, %v582, %v583
    %v585 = vrot.slane %v364, 2
    %v586 = vrot.slane %v368, 2
    %v587 = vsel %vm572, %v585, %v586
    %v588 = vrot.slane %v374, 2
    %v589 = vrot.slane %v378, 2
    %v590 = vsel %vm572, %v588, %v589
    %v591 = vrot.slane %v384, 2
    %v592 = vrot.slane %v388, 2
    %v593 = vsel %vm572, %v591, %v592
    %v594 = vrot.slane %v394, 2
    %v595 = vrot.slane %v398, 2
    %v596 = vsel %vm572, %v594, %v595
    %v605 = vadd.f32 %v548, %v575
    %v606 = vadd.f32 %v549, %v578
    %v607 = vadd.f32 %v550, %v581
    %v608 = vadd.f32 %v551, %v584
    %v609 = vadd.f32 %v552, %v587
    %v610 = vadd.f32 %v553, %v590
    %v611 = vadd.f32 %v554, %v593
    %v612 = vadd.f32 %v555, %v596
    %vm629 = vcmask 1044480
    %v630 = vrot.slane %v326, 3
    %v631 = vrot.slane %v330, 3
    %v632 = vsel %vm629, %v630, %v631
    %v633 = vrot.slane %v336, 3
    %v634 = vrot.slane %v340, 3
    %v635 = vsel %vm629, %v633, %v634
    %v636 = vrot.slane %v346, 3
    %v637 = vrot.slane %v350, 3
    %v638 = vsel %vm629, %v636, %v637
    %v639 = vrot.slane %v356, 3
    %v640 = vrot.slane %v360, 3
    %v641 = vsel %vm629, %v639, %v640
    %v642 = vrot.slane %v366, 3
    %v643 = vrot.slane %v370, 3
    %v644 = vsel %vm629, %v642, %v643
    %v645 = vrot.slane %v376, 3
    %v646 = vrot.slane %v380, 3
    %v647 = vsel %vm629, %v645, %v646
    %v648 = vrot.slane %v386, 3
    %v649 = vrot.slane %v390, 3
    %v650 = vsel %vm629, %v648, %v649
    %v651 = vrot.slane %v396, 3
    %v652 = vrot.slane %v400, 3
    %v653 = vsel %vm629, %v651, %v652
    %v662 = vadd.f32 %v605, %v632
    %v663 = vadd.f32 %v606, %v635
    %v664 = vadd.f32 %v607, %v638
    %v665 = vadd.f32 %v608, %v641
    %v666 = vadd.f32 %v609, %v644
    %v667 = vadd.f32 %v610, %v647
    %v668 = vadd.f32 %v611, %v650
    %v669 = vadd.f32 %v612, %v653
    %vm686 = vcmask 1043456
    %v687 = vrot.slane %v437, 4
    %v688 = vrot.slane %v440, 4
    %v689 = vsel %vm686, %v687, %v688
    %v690 = vrot.slane %v445, 4
    %v691 = vrot.slane %v448, 4
    %v692 = vsel %vm686, %v690, %v691
    %v693 = vrot.slane %v453, 4
    %v694 = vrot.slane %v456, 4
    %v695 = vsel %vm686, %v693, %v694
    %v696 = vrot.slane %v461, 4
    %v697 = vrot.slane %v464, 4
    %v698 = vsel %vm686, %v696, %v697
    %v699 = vrot.slane %v469, 4
    %v700 = vrot.slane %v472, 4
    %v701 = vsel %vm686, %v699, %v700
    %v702 = vrot.slane %v477, 4
    %v703 = vrot.slane %v480, 4
    %v704 = vsel %vm686, %v702, %v703
    %v705 = vrot.slane %v485, 4
    %v706 = vrot.slane %v488, 4
    %v707 = vsel %vm686, %v705, %v706
    %v708 = vrot.slane %v493, 4
    %v709 = vrot.slane %v496, 4
    %v710 = vsel %vm686, %v708, %v709
    %v719 = vadd.f32 %v662, %v689
    %v720 = vadd.f32 %v663, %v692
    %v721 = vadd.f32 %v664, %v695
    %v722 = vadd.f32 %v665, %v698
    %v723 = vadd.f32 %v666, %v701
    %v724 = vadd.f32 %v667, %v704
    %v725 = vadd.f32 %v668, %v707
    %v726 = vadd.f32 %v669, %v710
    %v727 = vld [vmem:[%s2] sm:$0x1]
    %v729 = vlaneseq
    %v730 = vshrl.u32 %v729, 7
    %v731 = vsub.s32 0, %v730
    %v732 = vrot.slane %v727, %v731
    %v734 = vadd.f32 %v719, %v732
    %v735 = vadd.f32 %v720, %v732
    %v736 = vadd.f32 %v721, %v732
    %v737 = vadd.f32 %v722, %v732
    %v738 = vadd.f32 %v723, %v732
    %v739 = vadd.f32 %v724, %v732
    %v740 = vadd.f32 %v725, %v732
    %v741 = vadd.f32 %v726, %v732
    %v742 = vmax.f32 %v734, 0.0
    %v743 = vmax.f32 %v735, 0.0
    %v744 = vmax.f32 %v736, 0.0
    %v745 = vmax.f32 %v737, 0.0
    %v746 = vmax.f32 %v738, 0.0
    %v747 = vmax.f32 %v739, 0.0
    %v748 = vmax.f32 %v740, 0.0
    %v749 = vmax.f32 %v741, 0.0
    %v750 = vld [vmem:[%s3] sm:$0xff]
    %v751 = vmul.f32 %v742, %v750
    %v752 = vmul.f32 %v743, %v750
    %v753 = vmul.f32 %v744, %v750
    %v754 = vmul.f32 %v745, %v750
    %v755 = vmul.f32 %v746, %v750
    %v756 = vmul.f32 %v747, %v750
    %v757 = vmul.f32 %v748, %v750
    %v758 = vmul.f32 %v749, %v750
    %v759 = vrot.slane %v751, 4
    %v760 = vmax.f32 %v751, %v759
    %v761 = vrot.slane %v760, 2
    %v762 = vmax.f32 %v760, %v761
    %v763 = vrot.slane %v762, 1
    %v764 = vmax.f32 %v762, %v763
    %v765 = vrot.slane %v752, 4
    %v766 = vmax.f32 %v752, %v765
    %v767 = vrot.slane %v766, 2
    %v768 = vmax.f32 %v766, %v767
    %v769 = vrot.slane %v768, 1
    %v770 = vmax.f32 %v768, %v769
    %v771 = vrot.slane %v753, 4
    %v772 = vmax.f32 %v753, %v771
    %v773 = vrot.slane %v772, 2
    %v774 = vmax.f32 %v772, %v773
    %v775 = vrot.slane %v774, 1
    %v776 = vmax.f32 %v774, %v775
    %v777 = vrot.slane %v754, 4
    %v778 = vmax.f32 %v754, %v777
    %v779 = vrot.slane %v778, 2
    %v780 = vmax.f32 %v778, %v779
    %v781 = vrot.slane %v780, 1
    %v782 = vmax.f32 %v780, %v781
    %v783 = vrot.slane %v755, 4
    %v784 = vmax.f32 %v755, %v783
    %v785 = vrot.slane %v784, 2
    %v786 = vmax.f32 %v784, %v785
    %v787 = vrot.slane %v786, 1
    %v788 = vmax.f32 %v786, %v787
    %v789 = vrot.slane %v756, 4
    %v790 = vmax.f32 %v756, %v789
    %v791 = vrot.slane %v790, 2
    %v792 = vmax.f32 %v790, %v791
    %v793 = vrot.slane %v792, 1
    %v794 = vmax.f32 %v792, %v793
    %v795 = vrot.slane %v757, 4
    %v796 = vmax.f32 %v757, %v795
    %v797 = vrot.slane %v796, 2
    %v798 = vmax.f32 %v796, %v797
    %v799 = vrot.slane %v798, 1
    %v800 = vmax.f32 %v798, %v799
    %v801 = vrot.slane %v758, 4
    %v802 = vmax.f32 %v758, %v801
    %v803 = vrot.slane %v802, 2
    %v804 = vmax.f32 %v802, %v803
    %v805 = vrot.slane %v804, 1
    %v806 = vmax.f32 %v804, %v805
    %v807 = vld [vmem:[#allocation2] sm:$0xff]
    %v808 = vld [vmem:[#allocation2 + $0x8] sm:$0xff]
    %v809 = vld [vmem:[#allocation2 + $0x10] sm:$0xff]
    %v810 = vld [vmem:[#allocation2 + $0x18] sm:$0xff]
    %v811 = vld [vmem:[#allocation2 + $0x20] sm:$0xff]
    %v812 = vld [vmem:[#allocation2 + $0x28] sm:$0xff]
    %v813 = vld [vmem:[#allocation2 + $0x30] sm:$0xff]
    %v814 = vld [vmem:[#allocation2 + $0x38] sm:$0xff]
    %v815 = vld [vmem:[#allocation2 + $0x40] sm:$0xff]
    %v816 = vld [vmem:[#allocation2 + $0x48] sm:$0xff]
    %v817 = vld [vmem:[#allocation2 + $0x50] sm:$0xff]
    %v818 = vld [vmem:[#allocation2 + $0x58] sm:$0xff]
    %v819 = vld [vmem:[#allocation2 + $0x60] sm:$0xff]
    %v820 = vld [vmem:[#allocation2 + $0x68] sm:$0xff]
    %v821 = vld [vmem:[#allocation2 + $0x70] sm:$0xff]
    %v822 = vld [vmem:[#allocation2 + $0x78] sm:$0xff]
    %v823 = vld [vmem:[%s5] sm:$0x1]
    %v825 = vlaneseq
    %v826 = vshrl.u32 %v825, 7
    %v827 = vsub.s32 0, %v826
    %v828 = vrot.slane %v823, %v827
    %vm838 = vcmask 1041409
    %v839 = vsel %vm838, %v770, %v764
    %vm840 = vcmask 1042434
    %v841 = vsel %vm840, %v776, %v839
    %vm842 = vcmask 1043459
    %v843 = vsel %vm842, %v782, %v841
    %vm844 = vcmask 1044484
    %v845 = vsel %vm844, %v788, %v843
    %vm846 = vcmask 1045509
    %v847 = vsel %vm846, %v794, %v845
    %vm848 = vcmask 1046534
    %v849 = vsel %vm848, %v800, %v847
    %vm850 = vcmask 1047559
    %v851 = vsel %vm850, %v806, %v849
    %853 = vmatprep.subr.mxu0 0.0
    %854 = vmatpush1.msra.mxu0 %v807
    %855 = vmatprep.subr.mxu0 0.0
    %856 = vmatpush1.msra.mxu0 %v808
    %857 = vmatprep.subr.mxu0 0.0
    %858 = vmatpush1.msra.mxu0 %v809
    %859 = vmatprep.subr.mxu0 0.0
    %860 = vmatpush1.msra.mxu0 %v810
    %861 = vmatprep.subr.mxu0 0.0
    %862 = vmatpush1.msra.mxu0 %v811
    %863 = vmatprep.subr.mxu0 0.0
    %864 = vmatpush1.msra.mxu0 %v812
    %865 = vmatprep.subr.mxu0 0.0
    %866 = vmatpush1.msra.mxu0 %v813
    %867 = vmatprep.subr.mxu0 0.0
    %868 = vmatpush1.msra.mxu0 %v814
    %869 = vmatprep.subr.mxu0 0.0
    %870 = vmatpush1.msra.mxu0 %v815
    %871 = vmatprep.subr.mxu0 0.0
    %872 = vmatpush1.msra.mxu0 %v816
    %873 = vmatprep.subr.mxu0 0.0
    %874 = vmatpush1.msra.mxu0 %v817
    %875 = vmatprep.subr.mxu0 0.0
    %876 = vmatpush1.msra.mxu0 %v818
    %877 = vmatprep.subr.mxu0 0.0
    %878 = vmatpush1.msra.mxu0 %v819
    %879 = vmatprep.subr.mxu0 0.0
    %880 = vmatpush1.msra.mxu0 %v820
    %881 = vmatprep.subr.mxu0 0.0
    %882 = vmatpush1.msra.mxu0 %v821
    %883 = vmatprep.subr.mxu0 0.0
    %884 = vmatpush1.msra.mxu0 %v822
    %885 = vmatprep.subr.mxu0 0.0
    %886 = vmatpush1.msra.mxu0 0.0
    %887 = vmatprep.subr.mxu0 0.0
    %888 = vmatpush1.msra.mxu0 0.0
    %889 = vmatprep.subr.mxu0 0.0
    %890 = vmatpush1.msra.mxu0 0.0
    %891 = vmatprep.subr.mxu0 0.0
    %892 = vmatpush1.msra.mxu0 0.0
    %893 = vmatprep.subr.mxu0 0.0
    %894 = vmatpush1.msra.mxu0 0.0
    %895 = vmatprep.subr.mxu0 0.0
    %896 = vmatpush1.msra.mxu0 0.0
    %897 = vmatprep.subr.mxu0 0.0
    %898 = vmatpush1.msra.mxu0 0.0
    %899 = vmatprep.subr.mxu0 0.0
    %900 = vmatpush1.msra.mxu0 0.0
    %901 = vmatprep.subr.mxu0 0.0
    %902 = vmatpush1.msra.mxu0 0.0
    %903 = vmatprep.subr.mxu0 0.0
    %904 = vmatpush1.msra.mxu0 0.0
    %905 = vmatprep.subr.mxu0 0.0
    %906 = vmatpush1.msra.mxu0 0.0
    %907 = vmatprep.subr.mxu0 0.0
    %908 = vmatpush1.msra.mxu0 0.0
    %909 = vmatprep.subr.mxu0 0.0
    %910 = vmatpush1.msra.mxu0 0.0
    %911 = vmatprep.subr.mxu0 0.0
    %912 = vmatpush1.msra.mxu0 0.0
    %913 = vmatprep.subr.mxu0 0.0
    %914 = vmatpush1.msra.mxu0 0.0
    %915 = vmatprep.subr.mxu0 0.0
    %916 = vmatpush1.msra.mxu0 0.0
    %917 = vmatprep.mubr.f32.mxu0 0.0
    %918 = vmatmul.mubr.f32.gmra.mrb[0].mxu0 %v851
    %v919 = vpop.f32.mrb[0].mxu0
    %v920 = vadd.f32 %v828, %v919
    %v921 = vpop.f32.mrb[0].mxu0
    %922 = vdwg.mxu0
    %923 = vmax.xlane.f32.xlu0 %v920
    %v924 = vpop.xlane.xlu0 %923
    %v925 = vsub.f32 %v920, %v924
    %v926 = vmul.f32 %v925, 1.442695
    %v927 = vpow.pop %v926
    %928 = vadd.xlane.f32.xlu0 %v927
    %v929 = vpop.xlane.xlu0 %928
    %v930 = vlog2.pop %v929
    %v931 = vmul.f32 %v930, 0.6931472
    %v932 = vsub.f32 %v925, %v931
    %933 = vst [vmem:[#allocation5] sm:$0xff] %v932
    // Predicated region
    $region30: #{tpu_custom_call.1} parent=1 // pred_check
      _
    $region31: #{tpu_custom_call.1} parent=1 // pred_check_branch
      %935 = sbr.rel (0) target = $region33
    $region32: #{tpu_custom_call.1} parent=1 // pred_region
      %s937 = ssub.s32 128, 128
      %938 = vsyncadd [#allocation4], %s937
      %s940 = sshll.u32 [#allocation5], 4
      %s941 = int_to_ptr.vmem [resolvable:$true] %s940
      %943 = dma.vmem_to_hbm [thread:$0]  %s941, 128, %s6, [#allocation4]
    $region33: #{tpu_custom_call.1} parent=1 // pred_fallthru
      _
    // Predicated region
    $region34: #{tpu_custom_call.1} parent=1 // pred_check
      _
    $region35: #{tpu_custom_call.1} parent=1 // pred_check_branch
      %945 = sbr.rel (0) target = $region37
    $region36: #{tpu_custom_call.1} parent=1 // pred_region
      %946 = dma.done [#allocation4], 128
    $region37: #{tpu_custom_call.1} parent=1 // pred_fallthru
      _
    %947 = vsyncpa [#allocation3], 1
    %948 = vsyncpa [#allocation4], 1

</llo_original>
